<compile_context>
chip_gen: v7x
topology: tpu7x:2x2x1
jax: 0.10.0
libtpu: 0.0.40
codegen_flags: <defaults>
</compile_context>

<pallas_src>
import functools

import jax
import jax.numpy as jnp
from jax.experimental import pallas as pl
from jax.experimental.pallas import tpu as pltpu


def _basic_block_kernel(x_ref, masks_ref, w1_ref, w2_ref, out_ref, *, W):
    """One image per grid step: conv1+bn1+relu -> conv2+bn2 -> +identity -> relu."""
    C, HW = x_ref.shape
    x = x_ref[...]                                        # (C, HW) f32

    # Hoist the (1,HW)->(C,HW) mask broadcasts so both convs reuse them.
    mask_bc = [jnp.broadcast_to(masks_ref[i:i + 1, :], (C, HW)) for i in range(8)]
    # Rows 8..15 of the mask slab: [ones, 0, 0, ..., 0] -> folded BN bias (K pad
    # to a multiple of 8 sublanes).
    bias_rows = masks_ref[8:16, :]                        # (8, HW) f32

    def shifted_taps(a):
        """Stack the 9 zero-padded spatial taps (+ bias rows): (9*C+8, HW) bf16."""
        pieces = []
        mi = 0
        for dy in (-1, 0, 1):
            for dx in (-1, 0, 1):
                s = dy * W + dx
                if s == 0:
                    pieces.append(a)
                else:
                    p = pltpu.roll(a, shift=(-s) % HW, axis=1)
                    pieces.append(p * mask_bc[mi])        # kill padding / wrap bleed
                    mi += 1
        pieces.append(bias_rows)
        return jnp.concatenate(pieces, axis=0).astype(jnp.bfloat16)

    # conv1 (BN1 scale+bias folded into w1) -> ReLU.  Single MXU dot, f32 acc.
    h1 = jnp.dot(w1_ref[...], shifted_taps(x), preferred_element_type=jnp.float32)
    h1 = jnp.maximum(h1, 0.0)

    # conv2 (BN2 folded into w2) -> + identity -> ReLU.  Lane-dense (C, HW) store.
    y = jnp.dot(w2_ref[...], shifted_taps(h1), preferred_element_type=jnp.float32)
    out_ref[...] = jnp.maximum(y + x, 0.0).astype(out_ref.dtype)


def _fold_conv_bn(w_hwio, scale, bias):
    """Fold BN scale+bias into a (Cout, 9*Cin + 8) bf16 weight slab.

    Column layout: column t*Cin + ci for tap t = ky*3 + kx (matching the tap
    order produced by shifted_taps), then [bias, 0, 0, ..., 0] (8 pad columns)
    contracted against the [ones, 0, ..., 0] rows appended to the tap slab.
    """
    kh, kw, cin, cout = w_hwio.shape
    w = w_hwio.astype(jnp.float32) * scale.astype(jnp.float32)[None, None, None, :]
    w = jnp.transpose(w, (3, 0, 1, 2)).reshape(cout, kh * kw * cin)
    bias_cols = jnp.concatenate(
        [bias.reshape(cout, 1).astype(jnp.float32),
         jnp.zeros((cout, 7), jnp.float32)], axis=1)
    return jnp.concatenate([w, bias_cols], axis=1).astype(jnp.bfloat16)


def _boundary_masks(H, W):
    """(16, H*W) f32: 8 per-lane boundary masks for the non-center taps, then a
    ones row (bias) and 7 zero rows (sublane padding)."""
    HW = H * W
    lane = jnp.arange(HW, dtype=jnp.int32)
    hh = lane // W
    ww = lane % W
    rows = []
    for dy in (-1, 0, 1):
        for dx in (-1, 0, 1):
            if dy == 0 and dx == 0:
                continue
            m = ((hh + dy >= 0) & (hh + dy < H) & (ww + dx >= 0) & (ww + dx < W))
            rows.append(m.astype(jnp.float32))
    rows.append(jnp.ones((HW,), jnp.float32))
    for _ in range(7):
        rows.append(jnp.zeros((HW,), jnp.float32))
    return jnp.stack(rows, axis=0)


@jax.jit
def basic_block_forward(x_nchw, params):
    """BasicBlock forward (stride=1, no downsample). Input/output NCHW f32."""
    N, C, H, W = x_nchw.shape
    kh, kw, cin, cout = params["w1"].shape
    # Identity residual requires inplanes == planes (stride=1, downsample=None).
    assert (kh, kw) == (3, 3) and cin == C and cout == C, \
        "only the default BasicBlock config (stride=1, no downsample) is supported"
    assert params["w2"].shape == (3, 3, C, C)
    HW = H * W
    K = 9 * C + 8

    w1 = _fold_conv_bn(params["w1"], params["scale1"], params["bias1"])
    w2 = _fold_conv_bn(params["w2"], params["scale2"], params["bias2"])
    masks = _boundary_masks(H, W)
    x = x_nchw.reshape(N, C, HW).astype(jnp.float32)   # free reshape, no transpose

    flops = 4 * 9 * C * C * HW * N                       # 2 convs, 2 flops/MAC
    bytes_accessed = 2 * N * C * HW * 4 + 2 * C * K * 2 + 16 * HW * 4

    out = pl.pallas_call(
        functools.partial(_basic_block_kernel, W=W),
        out_shape=jax.ShapeDtypeStruct((N, C, HW), jnp.float32),
        grid=(N,),
        in_specs=[
            pl.BlockSpec((None, C, HW), lambda n: (n, 0, 0)),   # x: one image/program
            pl.BlockSpec((16, HW), lambda n: (0, 0)),           # boundary masks + bias rows
            pl.BlockSpec((C, K), lambda n: (0, 0)),             # w1 (bf16, BN folded)
            pl.BlockSpec((C, K), lambda n: (0, 0)),             # w2 (bf16, BN folded)
        ],
        out_specs=pl.BlockSpec((None, C, HW), lambda n: (n, 0, 0)),
        compiler_params=pltpu.CompilerParams(
            dimension_semantics=("parallel",)),
        cost_estimate=pl.CostEstimate(
            flops=flops, transcendentals=0, bytes_accessed=bytes_accessed),
    )(x, masks, w1, w2)
    return out.reshape(N, C, H, W)


def make_params(key, inplanes, planes):
    """Deterministic synthetic params. BN folded to (scale, bias) for eval mode."""
    k = jax.random.split(key, 8)
    eps = 1e-5
    # Conv weights in HWIO layout (3, 3, Cin, Cout); PyTorch stores OIHW.
    w1 = jax.random.normal(k[0], (3, 3, inplanes, planes), jnp.float32) * 0.1
    w2 = jax.random.normal(k[1], (3, 3, planes, planes), jnp.float32) * 0.1
    gamma1 = 1.0 + 0.1 * jax.random.normal(k[2], (planes,), jnp.float32)
    beta1 = 0.1 * jax.random.normal(k[3], (planes,), jnp.float32)
    mean1 = 0.1 * jax.random.normal(k[4], (planes,), jnp.float32)
    var1 = jnp.abs(jax.random.normal(k[5], (planes,), jnp.float32)) + 0.5
    gamma2 = 1.0 + 0.1 * jax.random.normal(k[6], (planes,), jnp.float32)
    beta2 = 0.1 * jax.random.normal(k[7], (planes,), jnp.float32)
    mean2 = jnp.zeros((planes,), jnp.float32)
    var2 = jnp.ones((planes,), jnp.float32)
    scale1 = gamma1 / jnp.sqrt(var1 + eps)
    bias1 = beta1 - mean1 * scale1
    scale2 = gamma2 / jnp.sqrt(var2 + eps)
    bias2 = beta2 - mean2 * scale2
    return dict(w1=w1, w2=w2, scale1=scale1, bias1=bias1,
                scale2=scale2, bias2=bias2)


def _reference(x_nchw, params):
    """Pure-JAX f32 reference (HIGHEST-precision lax conv) for correctness check."""
    def conv(x, w):  # x: NCHW, w: HWIO
        return jax.lax.conv_general_dilated(
            x, w, window_strides=(1, 1), padding=((1, 1), (1, 1)),
            dimension_numbers=("NCHW", "HWIO", "NCHW"),
            precision=jax.lax.Precision.HIGHEST)
    s1 = params["scale1"][None, :, None, None]
    b1 = params["bias1"][None, :, None, None]
    s2 = params["scale2"][None, :, None, None]
    b2 = params["bias2"][None, :, None, None]
    out = jnp.maximum(conv(x_nchw, params["w1"]) * s1 + b1, 0.0)
    out = conv(out, params["w2"]) * s2 + b2 + x_nchw
    return jnp.maximum(out, 0.0)


if __name__ == "__main__":
    key = jax.random.PRNGKey(0)
    k_in, k_par = jax.random.split(key)
    N, C, H, W = 2, 8, 16, 16          # inplanes = planes = 8, stride = 1
    x = jax.random.normal(k_in, (N, C, H, W), jnp.float32)
    params = make_params(k_par, C, C)

    out = jax.block_until_ready(basic_block_forward(x, params))
    ref = jax.block_until_ready(_reference(x, params))

    assert out.shape == (N, C, H, W)
    max_err = float(jnp.max(jnp.abs(out - ref)))
    # bf16 MXU operands with f32 accumulation: allow bf16-level tolerance.
    assert jnp.allclose(out, ref, atol=5e-2, rtol=5e-2), f"mismatch vs reference: {max_err}"

    print("KERNEL_OK")
</pallas_src>

<mosaic_0001>
module attributes {stable_mosaic.version = 11 : i64} {
  func.func @_basic_block_kernel(%arg0: i32, %arg1: memref<1x8x256xf32, #tpu.memory_space<vmem>>, %arg2: memref<16x256xf32, #tpu.memory_space<vmem>>, %arg3: memref<8x80xbf16, #tpu.memory_space<vmem>>, %arg4: memref<8x80xbf16, #tpu.memory_space<vmem>>, %arg5: memref<1x8x256xf32, #tpu.memory_space<vmem>>) attributes {dimension_semantics = [#tpu.dimension_semantics<parallel>], iteration_bounds = array<i64: 2>, scalar_prefetch = 0 : i64, scratch_operands = 0 : i64, tpu.core_type = #tpu.core_type<tc>, window_params = [{transform_indices = @transform_0, window_bounds = array<i64: 1, 8, 256>}, {pipeline_mode = #tpu.pipeline_mode<synchronous>, transform_indices = @transform_1, window_bounds = array<i64: 16, 256>}, {pipeline_mode = #tpu.pipeline_mode<synchronous>, transform_indices = @transform_2, window_bounds = array<i64: 8, 80>}, {pipeline_mode = #tpu.pipeline_mode<synchronous>, transform_indices = @transform_3, window_bounds = array<i64: 8, 80>}, {transform_indices = @transform_4, window_bounds = array<i64: 1, 8, 256>}]} {
    %c0 = arith.constant 0 : index
    %c0_0 = arith.constant 0 : index
    %c0_1 = arith.constant 0 : index
    %0 = vector.load %arg1[%c0, %c0_0, %c0_1] : memref<1x8x256xf32, #tpu.memory_space<vmem>>, vector<1x8x256xf32>
    %1 = vector.shape_cast %0 : vector<1x8x256xf32> to vector<8x256xf32>
    %c0_2 = arith.constant 0 : index
    %c0_3 = arith.constant 0 : index
    %2 = vector.load %arg2[%c0_2, %c0_3] : memref<16x256xf32, #tpu.memory_space<vmem>>, vector<1x256xf32>
    %3 = vector.shape_cast %2 : vector<1x256xf32> to vector<1x256xf32>
    %4 = vector.broadcast %3 : vector<1x256xf32> to vector<8x256xf32>
    %c1 = arith.constant 1 : index
    %c0_4 = arith.constant 0 : index
    %5 = vector.load %arg2[%c1, %c0_4] : memref<16x256xf32, #tpu.memory_space<vmem>>, vector<1x256xf32>
    %6 = vector.shape_cast %5 : vector<1x256xf32> to vector<1x256xf32>
    %7 = vector.broadcast %6 : vector<1x256xf32> to vector<8x256xf32>
    %c2 = arith.constant 2 : index
    %c0_5 = arith.constant 0 : index
    %8 = vector.load %arg2[%c2, %c0_5] : memref<16x256xf32, #tpu.memory_space<vmem>>, vector<1x256xf32>
    %9 = vector.shape_cast %8 : vector<1x256xf32> to vector<1x256xf32>
    %10 = vector.broadcast %9 : vector<1x256xf32> to vector<8x256xf32>
    %c3 = arith.constant 3 : index
    %c0_6 = arith.constant 0 : index
    %11 = vector.load %arg2[%c3, %c0_6] : memref<16x256xf32, #tpu.memory_space<vmem>>, vector<1x256xf32>
    %12 = vector.shape_cast %11 : vector<1x256xf32> to vector<1x256xf32>
    %13 = vector.broadcast %12 : vector<1x256xf32> to vector<8x256xf32>
    %c4 = arith.constant 4 : index
    %c0_7 = arith.constant 0 : index
    %14 = vector.load %arg2[%c4, %c0_7] : memref<16x256xf32, #tpu.memory_space<vmem>>, vector<1x256xf32>
    %15 = vector.shape_cast %14 : vector<1x256xf32> to vector<1x256xf32>
    %16 = vector.broadcast %15 : vector<1x256xf32> to vector<8x256xf32>
    %c5 = arith.constant 5 : index
    %c0_8 = arith.constant 0 : index
    %17 = vector.load %arg2[%c5, %c0_8] : memref<16x256xf32, #tpu.memory_space<vmem>>, vector<1x256xf32>
    %18 = vector.shape_cast %17 : vector<1x256xf32> to vector<1x256xf32>
    %19 = vector.broadcast %18 : vector<1x256xf32> to vector<8x256xf32>
    %c6 = arith.constant 6 : index
    %c0_9 = arith.constant 0 : index
    %20 = vector.load %arg2[%c6, %c0_9] : memref<16x256xf32, #tpu.memory_space<vmem>>, vector<1x256xf32>
    %21 = vector.shape_cast %20 : vector<1x256xf32> to vector<1x256xf32>
    %22 = vector.broadcast %21 : vector<1x256xf32> to vector<8x256xf32>
    %c7 = arith.constant 7 : index
    %c0_10 = arith.constant 0 : index
    %23 = vector.load %arg2[%c7, %c0_10] : memref<16x256xf32, #tpu.memory_space<vmem>>, vector<1x256xf32>
    %24 = vector.shape_cast %23 : vector<1x256xf32> to vector<1x256xf32>
    %25 = vector.broadcast %24 : vector<1x256xf32> to vector<8x256xf32>
    %c8 = arith.constant 8 : index
    %c0_11 = arith.constant 0 : index
    %26 = vector.load %arg2[%c8, %c0_11] : memref<16x256xf32, #tpu.memory_space<vmem>>, vector<8x256xf32>
    %c0_12 = arith.constant 0 : index
    %c0_13 = arith.constant 0 : index
    %27 = vector.load %arg3[%c0_12, %c0_13] : memref<8x80xbf16, #tpu.memory_space<vmem>>, vector<8x80xbf16>
    %c17_i32 = arith.constant 17 : i32
    %28 = tpu.dynamic_rotate %1 by %c17_i32 dim 1 : vector<8x256xf32>, i32 -> vector<8x256xf32>
    %29 = arith.mulf %28, %4 : vector<8x256xf32>
    %c16_i32 = arith.constant 16 : i32
    %30 = tpu.dynamic_rotate %1 by %c16_i32 dim 1 : vector<8x256xf32>, i32 -> vector<8x256xf32>
    %31 = arith.mulf %30, %7 : vector<8x256xf32>
    %c15_i32 = arith.constant 15 : i32
    %32 = tpu.dynamic_rotate %1 by %c15_i32 dim 1 : vector<8x256xf32>, i32 -> vector<8x256xf32>
    %33 = arith.mulf %32, %10 : vector<8x256xf32>
    %c1_i32 = arith.constant 1 : i32
    %34 = tpu.dynamic_rotate %1 by %c1_i32 dim 1 : vector<8x256xf32>, i32 -> vector<8x256xf32>
    %35 = arith.mulf %34, %13 : vector<8x256xf32>
    %c255_i32 = arith.constant 255 : i32
    %36 = tpu.dynamic_rotate %1 by %c255_i32 dim 1 : vector<8x256xf32>, i32 -> vector<8x256xf32>
    %37 = arith.mulf %36, %16 : vector<8x256xf32>
    %c241_i32 = arith.constant 241 : i32
    %38 = tpu.dynamic_rotate %1 by %c241_i32 dim 1 : vector<8x256xf32>, i32 -> vector<8x256xf32>
    %39 = arith.mulf %38, %19 : vector<8x256xf32>
    %c240_i32 = arith.constant 240 : i32
    %40 = tpu.dynamic_rotate %1 by %c240_i32 dim 1 : vector<8x256xf32>, i32 -> vector<8x256xf32>
    %41 = arith.mulf %40, %22 : vector<8x256xf32>
    %c239_i32 = arith.constant 239 : i32
    %42 = tpu.dynamic_rotate %1 by %c239_i32 dim 1 : vector<8x256xf32>, i32 -> vector<8x256xf32>
    %43 = arith.mulf %42, %25 : vector<8x256xf32>
    %44 = tpu.concatenate %29, %31, %33, %35, %1, %37, %39, %41, %43, %26 in 0 : vector<8x256xf32>, vector<8x256xf32>, vector<8x256xf32>, vector<8x256xf32>, vector<8x256xf32>, vector<8x256xf32>, vector<8x256xf32>, vector<8x256xf32>, vector<8x256xf32>, vector<8x256xf32> -> vector<80x256xf32>
    %45 = arith.truncf %44 : vector<80x256xf32> to vector<80x256xbf16>
    %cst = arith.constant dense<0.000000e+00> : vector<8x256xf32>
    %46 = tpu.matmul %27, %45, %cst {dimension_numbers = #tpu.dot_dimension_numbers<[1], [0], [0], [1], [0, 0, 1, 1], [], []>} : vector<8x80xbf16>, vector<80x256xbf16>, vector<8x256xf32> -> vector<8x256xf32>
    %cst_14 = arith.constant 0.000000e+00 : f32
    %47 = vector.broadcast %cst_14 : f32 to vector<8x256xf32>
    %48 = arith.maximumf %46, %47 : vector<8x256xf32>
    %c0_15 = arith.constant 0 : index
    %c0_16 = arith.constant 0 : index
    %49 = vector.load %arg4[%c0_15, %c0_16] : memref<8x80xbf16, #tpu.memory_space<vmem>>, vector<8x80xbf16>
    %c17_i32_17 = arith.constant 17 : i32
    %50 = tpu.dynamic_rotate %48 by %c17_i32_17 dim 1 : vector<8x256xf32>, i32 -> vector<8x256xf32>
    %51 = arith.mulf %50, %4 : vector<8x256xf32>
    %c16_i32_18 = arith.constant 16 : i32
    %52 = tpu.dynamic_rotate %48 by %c16_i32_18 dim 1 : vector<8x256xf32>, i32 -> vector<8x256xf32>
    %53 = arith.mulf %52, %7 : vector<8x256xf32>
    %c15_i32_19 = arith.constant 15 : i32
    %54 = tpu.dynamic_rotate %48 by %c15_i32_19 dim 1 : vector<8x256xf32>, i32 -> vector<8x256xf32>
    %55 = arith.mulf %54, %10 : vector<8x256xf32>
    %c1_i32_20 = arith.constant 1 : i32
    %56 = tpu.dynamic_rotate %48 by %c1_i32_20 dim 1 : vector<8x256xf32>, i32 -> vector<8x256xf32>
    %57 = arith.mulf %56, %13 : vector<8x256xf32>
    %c255_i32_21 = arith.constant 255 : i32
    %58 = tpu.dynamic_rotate %48 by %c255_i32_21 dim 1 : vector<8x256xf32>, i32 -> vector<8x256xf32>
    %59 = arith.mulf %58, %16 : vector<8x256xf32>
    %c241_i32_22 = arith.constant 241 : i32
    %60 = tpu.dynamic_rotate %48 by %c241_i32_22 dim 1 : vector<8x256xf32>, i32 -> vector<8x256xf32>
    %61 = arith.mulf %60, %19 : vector<8x256xf32>
    %c240_i32_23 = arith.constant 240 : i32
    %62 = tpu.dynamic_rotate %48 by %c240_i32_23 dim 1 : vector<8x256xf32>, i32 -> vector<8x256xf32>
    %63 = arith.mulf %62, %22 : vector<8x256xf32>
    %c239_i32_24 = arith.constant 239 : i32
    %64 = tpu.dynamic_rotate %48 by %c239_i32_24 dim 1 : vector<8x256xf32>, i32 -> vector<8x256xf32>
    %65 = arith.mulf %64, %25 : vector<8x256xf32>
    %66 = tpu.concatenate %51, %53, %55, %57, %48, %59, %61, %63, %65, %26 in 0 : vector<8x256xf32>, vector<8x256xf32>, vector<8x256xf32>, vector<8x256xf32>, vector<8x256xf32>, vector<8x256xf32>, vector<8x256xf32>, vector<8x256xf32>, vector<8x256xf32>, vector<8x256xf32> -> vector<80x256xf32>
    %67 = arith.truncf %66 : vector<80x256xf32> to vector<80x256xbf16>
    %cst_25 = arith.constant dense<0.000000e+00> : vector<8x256xf32>
    %68 = tpu.matmul %49, %67, %cst_25 {dimension_numbers = #tpu.dot_dimension_numbers<[1], [0], [0], [1], [0, 0, 1, 1], [], []>} : vector<8x80xbf16>, vector<80x256xbf16>, vector<8x256xf32> -> vector<8x256xf32>
    %69 = arith.addf %68, %1 : vector<8x256xf32>
    %cst_26 = arith.constant 0.000000e+00 : f32
    %70 = vector.broadcast %cst_26 : f32 to vector<8x256xf32>
    %71 = arith.maximumf %69, %70 : vector<8x256xf32>
    %c0_27 = arith.constant 0 : index
    %c0_28 = arith.constant 0 : index
    %c0_29 = arith.constant 0 : index
    %72 = vector.load %arg5[%c0_27, %c0_28, %c0_29] : memref<1x8x256xf32, #tpu.memory_space<vmem>>, vector<1x8x256xf32>
    %73 = vector.shape_cast %72 : vector<1x8x256xf32> to vector<8x256xf32>
    %74 = vector.shape_cast %71 : vector<8x256xf32> to vector<1x8x256xf32>
    tpu.vector_store %arg5[%c0_27, %c0_28, %c0_29], %74 {strides = array<i32>} : memref<1x8x256xf32, #tpu.memory_space<vmem>>, vector<1x8x256xf32>,
    return
  }
  func.func @transform_0(%arg0: i32) -> (i32, i32, i32) {
    %c0_i32 = arith.constant 0 : i32
    %c0_i32_0 = arith.constant 0 : i32
    %c0_i32_1 = arith.constant 0 : i32
    return %arg0, %c0_i32, %c0_i32_0 : i32, i32, i32
  }
  func.func @transform_1(%arg0: i32) -> (i32, i32) {
    %c0_i32 = arith.constant 0 : i32
    %c0_i32_0 = arith.constant 0 : i32
    %c0_i32_1 = arith.constant 0 : i32
    return %c0_i32, %c0_i32_0 : i32, i32
  }
  func.func @transform_2(%arg0: i32) -> (i32, i32) {
    %c0_i32 = arith.constant 0 : i32
    %c0_i32_0 = arith.constant 0 : i32
    %c0_i32_1 = arith.constant 0 : i32
    return %c0_i32, %c0_i32_0 : i32, i32
  }
  func.func @transform_3(%arg0: i32) -> (i32, i32) {
    %c0_i32 = arith.constant 0 : i32
    %c0_i32_0 = arith.constant 0 : i32
    %c0_i32_1 = arith.constant 0 : i32
    return %c0_i32, %c0_i32_0 : i32, i32
  }
  func.func @transform_4(%arg0: i32) -> (i32, i32, i32) {
    %c0_i32 = arith.constant 0 : i32
    %c0_i32_0 = arith.constant 0 : i32
    %c0_i32_1 = arith.constant 0 : i32
    return %arg0, %c0_i32, %c0_i32_0 : i32, i32, i32
  }
}

</mosaic_0001>

<llo_original>
// kernel: basic_block_forward.1
$region0: #{basic_block_forward.1}
  #allocation0 [shape = 'u32[]', space=smem, size = 0x4, offset = 0x4, fixed_abs, tag = 'smem constant byte address 0x4 - core index']
  #allocation1 [shape = 'u32[144,128]{1,0:T(1,128)}', space=vmem, size = 0x12000, scoped, tag = 'internal scratch']
  %s0 = inlined_call_operand.vmem [shape: f32[2,8,256], index: 0, kind: input, shape index: {}]
  %s1 = inlined_call_operand.vmem [shape: f32[16,256], index: 1, kind: input, shape index: {}]
  %s2 = inlined_call_operand.vmem [shape: bf16[8,80], index: 2, kind: input, shape index: {}]
  %s3 = inlined_call_operand.vmem [shape: bf16[8,80], index: 3, kind: input, shape index: {}]
  %s4 = inlined_call_operand.vmem [shape: f32[2,8,256], index: 4, kind: output, shape index: {}]
  %s5 = sld [smem:[#allocation0]]
  $region49: #{basic_block_forward.1} parent=0
    _
  %s7 = ssub.s32 1, %s5
  %s8 = scalar_select 0, %s7, %s5
  loop: start=0, step=1, limit=4
  $region2: #{basic_block_forward.1} parent=0 // loop_pre_header
    _
  $region3: #{basic_block_forward.1} parent=0 // loop_header
    %s10 = sphi 0, %s14
    %p11 = scmp.ge.s32.totalorder %s10, 4
    %s20 = sphi 0, %s22
    %s23 = sphi 0, %s20
    %s24 = sphi 0, %s23
    %s40 = sphi 0, %s24
    %s44 = sphi 0, %s44
    %s46 = sphi 0, %s44
    %s47 = sphi 0, %s46
    %s61 = sphi 0, %s47
    %s65 = sphi 0, %s65
    %s67 = sphi 0, %s65
    %s68 = sphi 0, %s67
    %s82 = sphi 0, %s68
    %s86 = sphi 0, %s86
    %s88 = sphi 0, %s86
    %s89 = sphi 0, %s88
    %s103 = sphi 0, %s89
    %s109 = sphi 0, %s111
    %s112 = sphi 0, %s109
    %s113 = sphi 0, %s112
    %s129 = sphi 0, %s113
  $region4: #{basic_block_forward.1} parent=0 // loop_header_branch
    %13 = sbr.rel (%p11) target = $region8
  $region5: #{basic_block_forward.1} parent=0 // loop_body
    %s15 = ssub.s32 %s10, 1
    %s16 = ssub.s32 %s10, 2
    %s17 = sadd.s32 %s10, 1
    %s18 = ssub.s32 %s10, %s17
    %p19 = scmp.eq.s32.totalorder %s18, 0
    %s21 = sadd.s32 %s20, 1
    %s22 = scalar_select %p19, %s20, %s21
    %p25 = pneg %p19
    %p26 = scmp.eq.s32.totalorder %s10, 1
    %p27 = por %p25, %p26
    %p28 = scmp.ne.s32.totalorder %s20, %s23
    %p29 = scmp.eq.s32.totalorder %s10, 0
    %p30 = por %p28, %p29
    %p31 = scmp.ne.s32.totalorder %s20, %s23
    %p32 = scmp.eq.s32.totalorder %s15, 1
    %p33 = por %p31, %p32
    %p34 = scmp.ne.s32.totalorder %s23, %s24
    %p35 = scmp.eq.s32.totalorder %s15, 0
    %p36 = por %p34, %p35
    %p37 = scmp.ne.s32.totalorder %s23, %s24
    %p38 = scmp.eq.s32.totalorder %s16, 1
    %p39 = por %p37, %p38
    %p41 = scmp.ne.s32.totalorder %s24, %s40
    %p42 = scmp.eq.s32.totalorder %s16, 0
    %p43 = por %p41, %p42
    %s45 = sadd.s32 %s44, 1
    %p48 = scmp.eq.s32.totalorder %s10, 1
    %p49 = scmp.ne.s32.totalorder %s44, %s46
    %p50 = scmp.eq.s32.totalorder %s10, 0
    %p51 = por %p49, %p50
    %p52 = scmp.ne.s32.totalorder %s44, %s46
    %p53 = scmp.eq.s32.totalorder %s15, 1
    %p54 = por %p52, %p53
    %p55 = scmp.ne.s32.totalorder %s46, %s47
    %p56 = scmp.eq.s32.totalorder %s15, 0
    %p57 = por %p55, %p56
    %p58 = scmp.ne.s32.totalorder %s46, %s47
    %p59 = scmp.eq.s32.totalorder %s16, 1
    %p60 = por %p58, %p59
    %p62 = scmp.ne.s32.totalorder %s47, %s61
    %p63 = scmp.eq.s32.totalorder %s16, 0
    %p64 = por %p62, %p63
    %s66 = sadd.s32 %s65, 1
    %p69 = scmp.eq.s32.totalorder %s10, 1
    %p70 = scmp.ne.s32.totalorder %s65, %s67
    %p71 = scmp.eq.s32.totalorder %s10, 0
    %p72 = por %p70, %p71
    %p73 = scmp.ne.s32.totalorder %s65, %s67
    %p74 = scmp.eq.s32.totalorder %s15, 1
    %p75 = por %p73, %p74
    %p76 = scmp.ne.s32.totalorder %s67, %s68
    %p77 = scmp.eq.s32.totalorder %s15, 0
    %p78 = por %p76, %p77
    %p79 = scmp.ne.s32.totalorder %s67, %s68
    %p80 = scmp.eq.s32.totalorder %s16, 1
    %p81 = por %p79, %p80
    %p83 = scmp.ne.s32.totalorder %s68, %s82
    %p84 = scmp.eq.s32.totalorder %s16, 0
    %p85 = por %p83, %p84
    %s87 = sadd.s32 %s86, 1
    %p90 = scmp.eq.s32.totalorder %s10, 1
    %p91 = scmp.ne.s32.totalorder %s86, %s88
    %p92 = scmp.eq.s32.totalorder %s10, 0
    %p93 = por %p91, %p92
    %p94 = scmp.ne.s32.totalorder %s86, %s88
    %p95 = scmp.eq.s32.totalorder %s15, 1
    %p96 = por %p94, %p95
    %p97 = scmp.ne.s32.totalorder %s88, %s89
    %p98 = scmp.eq.s32.totalorder %s15, 0
    %p99 = por %p97, %p98
    %p100 = scmp.ne.s32.totalorder %s88, %s89
    %p101 = scmp.eq.s32.totalorder %s16, 1
    %p102 = por %p100, %p101
    %p104 = scmp.ne.s32.totalorder %s89, %s103
    %p105 = scmp.eq.s32.totalorder %s16, 0
    %p106 = por %p104, %p105
    %s107 = ssub.s32 %s10, %s17
    %p108 = scmp.eq.s32.totalorder %s107, 0
    %s110 = sadd.s32 %s109, 1
    %s111 = scalar_select %p108, %s109, %s110
    %p114 = pneg %p108
    %p115 = scmp.eq.s32.totalorder %s10, 1
    %p116 = por %p114, %p115
    %p117 = scmp.ne.s32.totalorder %s109, %s112
    %p118 = scmp.eq.s32.totalorder %s10, 0
    %p119 = por %p117, %p118
    %p120 = scmp.ne.s32.totalorder %s109, %s112
    %p121 = scmp.eq.s32.totalorder %s15, 1
    %p122 = por %p120, %p121
    %p123 = scmp.ne.s32.totalorder %s112, %s113
    %p124 = scmp.eq.s32.totalorder %s15, 0
    %p125 = por %p123, %p124
    %p126 = scmp.ne.s32.totalorder %s112, %s113
    %p127 = scmp.eq.s32.totalorder %s16, 1
    %p128 = por %p126, %p127
    %p130 = scmp.ne.s32.totalorder %s113, %s129
    %p131 = scmp.eq.s32.totalorder %s16, 0
    %p132 = por %p130, %p131
    %p133 = scmp.le.s32.totalorder 1, %s10
    %p134 = scmp.lt.s32.totalorder %s10, 3
    %p135 = pnand %p133, %p134
    %p136 = pneg %p135
    // Predicated region
    $region9: #{basic_block_forward.1} parent=5 // pred_check
      _
    $region10: #{basic_block_forward.1} parent=5 // pred_check_branch
      %138 = sbr.rel (%p135) target = $region12
    $region11: #{basic_block_forward.1} parent=5 // pred_region
      %s139 = ssub.s32 %s10, 1
      // Predicated region
      $region13: #{basic_block_forward.1} parent=11 // pred_check
        %p140 = pneg %p57
      $region14: #{basic_block_forward.1} parent=11 // pred_check_branch
        %142 = sbr.rel (%p140) target = $region16
      $region15: #{basic_block_forward.1} parent=11 // pred_region
        _
      $region16: #{basic_block_forward.1} parent=11 // pred_fallthru
        _
      // Predicated region
      $region17: #{basic_block_forward.1} parent=11 // pred_check
        %p143 = pneg %p78
      $region18: #{basic_block_forward.1} parent=11 // pred_check_branch
        %145 = sbr.rel (%p143) target = $region20
      $region19: #{basic_block_forward.1} parent=11 // pred_region
        _
      $region20: #{basic_block_forward.1} parent=11 // pred_fallthru
        _
      // Predicated region
      $region21: #{basic_block_forward.1} parent=11 // pred_check
        %p146 = pneg %p99
      $region22: #{basic_block_forward.1} parent=11 // pred_check_branch
        %148 = sbr.rel (%p146) target = $region24
      $region23: #{basic_block_forward.1} parent=11 // pred_region
        _
      $region24: #{basic_block_forward.1} parent=11 // pred_fallthru
        _
    $region12: #{basic_block_forward.1} parent=5 // pred_fallthru
      _
    %p149 = scmp.lt.s32.totalorder %s10, 2
    // Predicated region
    $region25: #{basic_block_forward.1} parent=5 // pred_check
      %p150 = pneg %p149
    $region26: #{basic_block_forward.1} parent=5 // pred_check_branch
      %152 = sbr.rel (%p150) target = $region28
    $region27: #{basic_block_forward.1} parent=5 // pred_region
      // Predicated region
      $region29: #{basic_block_forward.1} parent=27 // pred_check
        %p153 = pneg %p30
      $region30: #{basic_block_forward.1} parent=27 // pred_check_branch
        %155 = sbr.rel (%p153) target = $region32
      $region31: #{basic_block_forward.1} parent=27 // pred_region
        %p156 = scmp.lt.s32.totalorder %s10, 1
        %s157 = scalar_select %p156, %s10, 1
        %s158 = smul.addr %s157, 2
        %s159 = smul.addr %s158, 8
        %s160 = scalar_lea.vmem %s0, %s159
      $region32: #{basic_block_forward.1} parent=27 // pred_fallthru
        _
    $region28: #{basic_block_forward.1} parent=5 // pred_fallthru
      _
    %p161 = scmp.le.s32.totalorder 1, %s10
    %p162 = scmp.lt.s32.totalorder %s10, 3
    %p163 = pnand %p161, %p162
    %p164 = pneg %p163
    // Predicated region
    $region33: #{basic_block_forward.1} parent=5 // pred_check
      _
    $region34: #{basic_block_forward.1} parent=5 // pred_check_branch
      %166 = sbr.rel (%p163) target = $region36
    $region35: #{basic_block_forward.1} parent=5 // pred_region
      %s167 = ssub.s32 %s10, 1
      %p168 = scmp.lt.s32.totalorder %s15, 1
      %s169 = scalar_select %p168, %s15, 1
      %s170 = smul.addr %s169, 2
      %s171 = smul.addr %s170, 8
      %s172 = scalar_lea.vmem %s0, %s171
      %p173 = pneg %p36
      %p174 = pneg %p33
      %p175 = pneg %p57
      %p176 = pneg %p54
      %p177 = pneg %p78
      %p178 = pneg %p75
      %p179 = pneg %p99
      %p180 = pneg %p96
      %p181 = pneg %p125
      %p182 = pneg %p122
      %p183 = scmp.lt.s32.totalorder %s15, 1
      %s184 = scalar_select %p183, %s15, 1
      %s185 = smul.addr %s184, 2
      %s186 = smul.addr %s185, 8
      %s187 = scalar_lea.vmem %s4, %s186
      %p188 = scmp.lt.s32.totalorder %s15, 1
      %s189 = scalar_select %p188, %s15, 1
      %s190 = smul.addr %s189, 2
      %s191 = smul.addr %s190, 8
      %s192 = scalar_lea.vmem %s0, %s191
      %p193 = scmp.lt.s32.totalorder %s15, 1
      %s194 = scalar_select %p193, %s15, 1
      %s195 = smul.addr %s194, 2
      %s196 = smul.addr %s195, 8
      %s197 = scalar_lea.vmem %s4, %s196
      %v199 = vld [vmem:[%s192] sm:$0xff]
      %v200 = vld [vmem:[%s192 + $0x8] sm:$0xff]
      %v201 = vld [vmem:[%s1] ss:$8 sm:$0x3]
      %v203 = vlaneseq
      %v204 = vshrl.u32 %v203, 7
      %v205 = vsub.s32 0, %v204
      %v206 = vrot.slane %v201, %v205
      %v207 = vlaneseq
      %v208 = vshrl.u32 %v207, 7
      %v209 = vsub.s32 1, %v208
      %v210 = vrot.slane %v201, %v209
      %s213 = scalar_lea.vmem %s1, 1
      %v214 = vld [vmem:[%s213] ss:$8 sm:$0x3]
      %v216 = vlaneseq
      %v217 = vshrl.u32 %v216, 7
      %v218 = vsub.s32 0, %v217
      %v219 = vrot.slane %v214, %v218
      %v220 = vlaneseq
      %v221 = vshrl.u32 %v220, 7
      %v222 = vsub.s32 1, %v221
      %v223 = vrot.slane %v214, %v222
      %s226 = scalar_lea.vmem %s1, 2
      %v227 = vld [vmem:[%s226] ss:$8 sm:$0x3]
      %v229 = vlaneseq
      %v230 = vshrl.u32 %v229, 7
      %v231 = vsub.s32 0, %v230
      %v232 = vrot.slane %v227, %v231
      %v233 = vlaneseq
      %v234 = vshrl.u32 %v233, 7
      %v235 = vsub.s32 1, %v234
      %v236 = vrot.slane %v227, %v235
      %s239 = scalar_lea.vmem %s1, 3
      %v240 = vld [vmem:[%s239] ss:$8 sm:$0x3]
      %v242 = vlaneseq
      %v243 = vshrl.u32 %v242, 7
      %v244 = vsub.s32 0, %v243
      %v245 = vrot.slane %v240, %v244
      %v246 = vlaneseq
      %v247 = vshrl.u32 %v246, 7
      %v248 = vsub.s32 1, %v247
      %v249 = vrot.slane %v240, %v248
      %s252 = scalar_lea.vmem %s1, 4
      %v253 = vld [vmem:[%s252] ss:$8 sm:$0x3]
      %v255 = vlaneseq
      %v256 = vshrl.u32 %v255, 7
      %v257 = vsub.s32 0, %v256
      %v258 = vrot.slane %v253, %v257
      %v259 = vlaneseq
      %v260 = vshrl.u32 %v259, 7
      %v261 = vsub.s32 1, %v260
      %v262 = vrot.slane %v253, %v261
      %s265 = scalar_lea.vmem %s1, 5
      %v266 = vld [vmem:[%s265] ss:$8 sm:$0x3]
      %v268 = vlaneseq
      %v269 = vshrl.u32 %v268, 7
      %v270 = vsub.s32 0, %v269
      %v271 = vrot.slane %v266, %v270
      %v272 = vlaneseq
      %v273 = vshrl.u32 %v272, 7
      %v274 = vsub.s32 1, %v273
      %v275 = vrot.slane %v266, %v274
      %s278 = scalar_lea.vmem %s1, 6
      %v279 = vld [vmem:[%s278] ss:$8 sm:$0x3]
      %v281 = vlaneseq
      %v282 = vshrl.u32 %v281, 7
      %v283 = vsub.s32 0, %v282
      %v284 = vrot.slane %v279, %v283
      %v285 = vlaneseq
      %v286 = vshrl.u32 %v285, 7
      %v287 = vsub.s32 1, %v286
      %v288 = vrot.slane %v279, %v287
      %s291 = scalar_lea.vmem %s1, 7
      %v292 = vld [vmem:[%s291] ss:$8 sm:$0x3]
      %v294 = vlaneseq
      %v295 = vshrl.u32 %v294, 7
      %v296 = vsub.s32 0, %v295
      %v297 = vrot.slane %v292, %v296
      %v298 = vlaneseq
      %v299 = vshrl.u32 %v298, 7
      %v300 = vsub.s32 1, %v299
      %v301 = vrot.slane %v292, %v300
      %v304 = vld [vmem:[%s1 + $0x10] sm:$0xff]
      %v305 = vld [vmem:[%s1 + $0x18] sm:$0xff]
      %v306 = vld [vmem:[%s2] sm:$0xf]
      %307 = vrot.lane.b32.xlu0 %v199, 17
      %v308 = vpop.permute.xlu0 %307
      %309 = vrot.lane.b32.xlu0 %v200, 17
      %v310 = vpop.permute.xlu0 %309
      %v311 = vlaneseq
      %v312 = vand.u32 %v311, 127
      %vm313 = vcmp.lt.s32.totalorder %v312, 17
      %v314 = vsel %vm313, %v308, %v310
      %v315 = vsel %vm313, %v310, %v308
      %v316 = vmul.f32 %v315, %v206
      %v317 = vmul.f32 %v314, %v210
      %318 = vrot.lane.b32.xlu0 %v199, 16
      %v319 = vpop.permute.xlu0 %318
      %320 = vrot.lane.b32.xlu0 %v200, 16
      %v321 = vpop.permute.xlu0 %320
      %vm322 = vcmp.lt.s32.totalorder %v312, 16
      %v323 = vsel %vm322, %v319, %v321
      %v324 = vsel %vm322, %v321, %v319
      %v325 = vmul.f32 %v324, %v219
      %v326 = vmul.f32 %v323, %v223
      %327 = vrot.lane.b32.xlu0 %v199, 15
      %v328 = vpop.permute.xlu0 %327
      %329 = vrot.lane.b32.xlu0 %v200, 15
      %v330 = vpop.permute.xlu0 %329
      %vm331 = vcmp.lt.s32.totalorder %v312, 15
      %v332 = vsel %vm331, %v328, %v330
      %v333 = vsel %vm331, %v330, %v328
      %v334 = vmul.f32 %v333, %v232
      %v335 = vmul.f32 %v332, %v236
      %336 = vrot.lane.b32.xlu0 %v199, 1
      %v337 = vpop.permute.xlu0 %336
      %338 = vrot.lane.b32.xlu0 %v200, 1
      %v339 = vpop.permute.xlu0 %338
      %vm340 = vcmp.lt.s32.totalorder %v312, 1
      %v341 = vsel %vm340, %v337, %v339
      %v342 = vsel %vm340, %v339, %v337
      %v343 = vmul.f32 %v342, %v245
      %v344 = vmul.f32 %v341, %v249
      %345 = vrot.lane.b32.xlu0 %v199, 127
      %v346 = vpop.permute.xlu0 %345
      %347 = vrot.lane.b32.xlu0 %v200, 127
      %v348 = vpop.permute.xlu0 %347
      %vm349 = vcmp.lt.s32.totalorder %v312, 127
      %v350 = vsel %vm349, %v346, %v348
      %v351 = vsel %vm349, %v348, %v346
      %v352 = vmul.f32 %v350, %v258
      %v353 = vmul.f32 %v351, %v262
      %354 = vrot.lane.b32.xlu0 %v199, 113
      %v355 = vpop.permute.xlu0 %354
      %356 = vrot.lane.b32.xlu0 %v200, 113
      %v357 = vpop.permute.xlu0 %356
      %vm358 = vcmp.lt.s32.totalorder %v312, 113
      %v359 = vsel %vm358, %v355, %v357
      %v360 = vsel %vm358, %v357, %v355
      %v361 = vmul.f32 %v359, %v271
      %v362 = vmul.f32 %v360, %v275
      %363 = vrot.lane.b32.xlu0 %v199, 112
      %v364 = vpop.permute.xlu0 %363
      %365 = vrot.lane.b32.xlu0 %v200, 112
      %v366 = vpop.permute.xlu0 %365
      %vm367 = vcmp.lt.s32.totalorder %v312, 112
      %v368 = vsel %vm367, %v364, %v366
      %v369 = vsel %vm367, %v366, %v364
      %v370 = vmul.f32 %v368, %v284
      %v371 = vmul.f32 %v369, %v288
      %372 = vrot.lane.b32.xlu0 %v199, 111
      %v373 = vpop.permute.xlu0 %372
      %374 = vrot.lane.b32.xlu0 %v200, 111
      %v375 = vpop.permute.xlu0 %374
      %vm376 = vcmp.lt.s32.totalorder %v312, 111
      %v377 = vsel %vm376, %v373, %v375
      %v378 = vsel %vm376, %v375, %v373
      %v379 = vmul.f32 %v377, %v297
      %v380 = vmul.f32 %v378, %v301
      %v381 = vpack.c.bf16 %v325, %v316
      %v382 = vpack.c.bf16 %v326, %v317
      %v383 = vpack.c.bf16 %v343, %v334
      %v384 = vpack.c.bf16 %v344, %v335
      %v385 = vpack.c.bf16 %v352, %v199
      %v386 = vpack.c.bf16 %v353, %v200
      %v387 = vpack.c.bf16 %v370, %v361
      %v388 = vpack.c.bf16 %v371, %v362
      %v389 = vpack.c.bf16 %v304, %v379
      %v390 = vpack.c.bf16 %v305, %v380
      %vm391 = vcmask 654336
      %v393 = vsel %vm391, %v306, 0
      %395 = vmatprep.subr.bf16.mxu0 %v382
      %396 = vmatpush1.bf16.msra.mxu0 %v381
      %397 = vmatprep.subr.bf16.mxu0 %v384
      %398 = vmatpush1.bf16.msra.mxu0 %v383
      %399 = vmatprep.subr.bf16.mxu0 %v386
      %400 = vmatpush1.bf16.msra.mxu0 %v385
      %401 = vmatprep.subr.bf16.mxu0 %v388
      %402 = vmatpush1.bf16.msra.mxu0 %v387
      %403 = vmatprep.subr.bf16.mxu0 %v390
      %404 = vmatpush1.bf16.msra.mxu0 %v389
      %405 = vmatprep.subr.bf16.mxu0 0
      %406 = vmatpush1.bf16.msra.mxu0 0
      %407 = vmatprep.subr.bf16.mxu0 0
      %408 = vmatpush1.bf16.msra.mxu0 0
      %409 = vmatprep.subr.bf16.mxu0 0
      %410 = vmatpush1.bf16.msra.mxu0 0
      %411 = vmatprep.subr.bf16.mxu0 0
      %412 = vmatpush1.bf16.msra.mxu0 0
      %413 = vmatprep.subr.bf16.mxu0 0
      %414 = vmatpush1.bf16.msra.mxu0 0
      %415 = vmatprep.subr.bf16.mxu0 0
      %416 = vmatpush1.bf16.msra.mxu0 0
      %417 = vmatprep.subr.bf16.mxu0 0
      %418 = vmatpush1.bf16.msra.mxu0 0
      %419 = vmatprep.subr.bf16.mxu0 0
      %420 = vmatpush1.bf16.msra.mxu0 0
      %421 = vmatprep.subr.bf16.mxu0 0
      %422 = vmatpush1.bf16.msra.mxu0 0
      %423 = vmatprep.subr.bf16.mxu0 0
      %424 = vmatpush1.bf16.msra.mxu0 0
      %425 = vmatprep.subr.bf16.mxu0 0
      %426 = vmatpush1.bf16.msra.mxu0 0
      %427 = vmatprep.mubr.bf16.mxu0 0
      %428 = vmatmul.mubr.bf16.gmra.mrb[0].mxu0 %v393
      %v429 = vpop.f32.mrb[0].mxu0
      %v430 = vadd.f32 0.0, %v429
      %v431 = vpop.f32.mrb[0].mxu0
      %v432 = vadd.f32 0.0, %v431
      %v433 = vpop.f32.mrb[0].mxu0
      %v434 = vpop.f32.mrb[0].mxu0
      %435 = vdwg.mxu0
      %v436 = vmax.f32 %v430, 0.0
      %v437 = vmax.f32 %v432, 0.0
      %v438 = vld [vmem:[%s3] sm:$0xf]
      %439 = vrot.lane.b32.xlu0 %v436, 17
      %v440 = vpop.permute.xlu0 %439
      %441 = vrot.lane.b32.xlu0 %v437, 17
      %v442 = vpop.permute.xlu0 %441
      %v443 = vsel %vm313, %v440, %v442
      %v444 = vsel %vm313, %v442, %v440
      %v445 = vmul.f32 %v444, %v206
      %v446 = vmul.f32 %v443, %v210
      %447 = vrot.lane.b32.xlu0 %v436, 16
      %v448 = vpop.permute.xlu0 %447
      %449 = vrot.lane.b32.xlu0 %v437, 16
      %v450 = vpop.permute.xlu0 %449
      %v451 = vsel %vm322, %v448, %v450
      %v452 = vsel %vm322, %v450, %v448
      %v453 = vmul.f32 %v452, %v219
      %v454 = vmul.f32 %v451, %v223
      %455 = vrot.lane.b32.xlu0 %v436, 15
      %v456 = vpop.permute.xlu0 %455
      %457 = vrot.lane.b32.xlu0 %v437, 15
      %v458 = vpop.permute.xlu0 %457
      %v459 = vsel %vm331, %v456, %v458
      %v460 = vsel %vm331, %v458, %v456
      %v461 = vmul.f32 %v460, %v232
      %v462 = vmul.f32 %v459, %v236
      %463 = vrot.lane.b32.xlu0 %v436, 1
      %v464 = vpop.permute.xlu0 %463
      %465 = vrot.lane.b32.xlu0 %v437, 1
      %v466 = vpop.permute.xlu0 %465
      %v467 = vsel %vm340, %v464, %v466
      %v468 = vsel %vm340, %v466, %v464
      %v469 = vmul.f32 %v468, %v245
      %v470 = vmul.f32 %v467, %v249
      %471 = vrot.lane.b32.xlu0 %v436, 127
      %v472 = vpop.permute.xlu0 %471
      %473 = vrot.lane.b32.xlu0 %v437, 127
      %v474 = vpop.permute.xlu0 %473
      %v475 = vsel %vm349, %v472, %v474
      %v476 = vsel %vm349, %v474, %v472
      %v477 = vmul.f32 %v475, %v258
      %v478 = vmul.f32 %v476, %v262
      %479 = vrot.lane.b32.xlu0 %v436, 113
      %v480 = vpop.permute.xlu0 %479
      %481 = vrot.lane.b32.xlu0 %v437, 113
      %v482 = vpop.permute.xlu0 %481
      %v483 = vsel %vm358, %v480, %v482
      %v484 = vsel %vm358, %v482, %v480
      %v485 = vmul.f32 %v483, %v271
      %v486 = vmul.f32 %v484, %v275
      %487 = vrot.lane.b32.xlu0 %v436, 112
      %v488 = vpop.permute.xlu0 %487
      %489 = vrot.lane.b32.xlu0 %v437, 112
      %v490 = vpop.permute.xlu0 %489
      %v491 = vsel %vm367, %v488, %v490
      %v492 = vsel %vm367, %v490, %v488
      %v493 = vmul.f32 %v491, %v284
      %v494 = vmul.f32 %v492, %v288
      %495 = vrot.lane.b32.xlu0 %v436, 111
      %v496 = vpop.permute.xlu0 %495
      %497 = vrot.lane.b32.xlu0 %v437, 111
      %v498 = vpop.permute.xlu0 %497
      %v499 = vsel %vm376, %v496, %v498
      %v500 = vsel %vm376, %v498, %v496
      %v501 = vmul.f32 %v499, %v297
      %v502 = vmul.f32 %v500, %v301
      %v503 = vpack.c.bf16 %v453, %v445
      %v504 = vpack.c.bf16 %v454, %v446
      %v505 = vpack.c.bf16 %v469, %v461
      %v506 = vpack.c.bf16 %v470, %v462
      %v507 = vpack.c.bf16 %v477, %v436
      %v508 = vpack.c.bf16 %v478, %v437
      %v509 = vpack.c.bf16 %v493, %v485
      %v510 = vpack.c.bf16 %v494, %v486
      %v511 = vpack.c.bf16 %v304, %v501
      %v512 = vpack.c.bf16 %v305, %v502
      %v514 = vsel %vm391, %v438, 0
      %516 = vmatprep.subr.bf16.mxu0 %v504
      %517 = vmatpush1.bf16.msra.mxu0 %v503
      %518 = vmatprep.subr.bf16.mxu0 %v506
      %519 = vmatpush1.bf16.msra.mxu0 %v505
      %520 = vmatprep.subr.bf16.mxu0 %v508
      %521 = vmatpush1.bf16.msra.mxu0 %v507
      %522 = vmatprep.subr.bf16.mxu0 %v510
      %523 = vmatpush1.bf16.msra.mxu0 %v509
      %524 = vmatprep.subr.bf16.mxu0 %v512
      %525 = vmatpush1.bf16.msra.mxu0 %v511
      %526 = vmatprep.subr.bf16.mxu0 0
      %527 = vmatpush1.bf16.msra.mxu0 0
      %528 = vmatprep.subr.bf16.mxu0 0
      %529 = vmatpush1.bf16.msra.mxu0 0
      %530 = vmatprep.subr.bf16.mxu0 0
      %531 = vmatpush1.bf16.msra.mxu0 0
      %532 = vmatprep.subr.bf16.mxu0 0
      %533 = vmatpush1.bf16.msra.mxu0 0
      %534 = vmatprep.subr.bf16.mxu0 0
      %535 = vmatpush1.bf16.msra.mxu0 0
      %536 = vmatprep.subr.bf16.mxu0 0
      %537 = vmatpush1.bf16.msra.mxu0 0
      %538 = vmatprep.subr.bf16.mxu0 0
      %539 = vmatpush1.bf16.msra.mxu0 0
      %540 = vmatprep.subr.bf16.mxu0 0
      %541 = vmatpush1.bf16.msra.mxu0 0
      %542 = vmatprep.subr.bf16.mxu0 0
      %543 = vmatpush1.bf16.msra.mxu0 0
      %544 = vmatprep.subr.bf16.mxu0 0
      %545 = vmatpush1.bf16.msra.mxu0 0
      %546 = vmatprep.subr.bf16.mxu0 0
      %547 = vmatpush1.bf16.msra.mxu0 0
      %548 = vmatprep.mubr.bf16.mxu0 0
      %549 = vmatmul.mubr.bf16.gmra.mrb[0].mxu0 %v514
      %v550 = vpop.f32.mrb[0].mxu0
      %v551 = vadd.f32 %v199, %v550
      %v552 = vpop.f32.mrb[0].mxu0
      %v553 = vadd.f32 %v200, %v552
      %v554 = vpop.f32.mrb[0].mxu0
      %v555 = vpop.f32.mrb[0].mxu0
      %556 = vdwg.mxu0
      %v557 = vmax.f32 %v551, 0.0
      %v558 = vmax.f32 %v553, 0.0
      %559 = vst [vmem:[%s197] sm:$0xff] %v557
      %560 = vst [vmem:[%s197 + $0x8] sm:$0xff] %v558
      %p561 = scmp.lt.s32.totalorder %s15, 1
      %s562 = scalar_select %p561, %s15, 1
      %s563 = smul.addr %s562, 2
      %s564 = smul.addr %s563, 8
      %s565 = scalar_lea.vmem %s4, %s564
      // Predicated region
      $region37: #{basic_block_forward.1} parent=35 // pred_check
        %p566 = pneg %p122
      $region38: #{basic_block_forward.1} parent=35 // pred_check_branch
        %568 = sbr.rel (%p566) target = $region40
      $region39: #{basic_block_forward.1} parent=35 // pred_region
        _
      $region40: #{basic_block_forward.1} parent=35 // pred_fallthru
        _
    $region36: #{basic_block_forward.1} parent=5 // pred_fallthru
      _
    %p569 = scmp.le.s32.totalorder 2, %s10
    // Predicated region
    $region41: #{basic_block_forward.1} parent=5 // pred_check
      %p570 = pneg %p569
    $region42: #{basic_block_forward.1} parent=5 // pred_check_branch
      %572 = sbr.rel (%p570) target = $region44
    $region43: #{basic_block_forward.1} parent=5 // pred_region
      %s573 = ssub.s32 %s10, 2
      // Predicated region
      $region45: #{basic_block_forward.1} parent=43 // pred_check
        %p574 = pneg %p128
      $region46: #{basic_block_forward.1} parent=43 // pred_check_branch
        %576 = sbr.rel (%p574) target = $region48
      $region47: #{basic_block_forward.1} parent=43 // pred_region
        %p577 = scmp.lt.s32.totalorder %s16, 1
        %s578 = scalar_select %p577, %s16, 1
        %s579 = smul.addr %s578, 2
        %s580 = smul.addr %s579, 8
        %s581 = scalar_lea.vmem %s4, %s580
      $region48: #{basic_block_forward.1} parent=43 // pred_fallthru
        _
    $region44: #{basic_block_forward.1} parent=5 // pred_fallthru
      _
  $region6: #{basic_block_forward.1} parent=0 // loop_footer
    %s14 = sadd.s32 1, %s10
  $region7: #{basic_block_forward.1} parent=0 // loop_footer_branch
    %9 = sbr.rel target = $region3
  $region8: #{basic_block_forward.1} parent=0 // loop_exit
    _

</llo_original>
